<compile_context>
chip_gen: v7x
topology: tpu7x:2x2x1
jax: 0.10.0
libtpu: 0.0.40
codegen_flags: <defaults>
</compile_context>

<pallas_src>
import jax
import jax.numpy as jnp
from jax.experimental import pallas as pl
from jax.experimental.pallas import tpu as pltpu


def _round_up(n, m):
    return ((n + m - 1) // m) * m


def _patch_embed_kernel(p_ref, w_ref, b_ref, o_ref):
    # p_ref: (tm, K) patch rows; w_ref: (K, E); b_ref: (1, E) f32; o_ref: (tm, E).
    # f32 accumulation on the MXU, bias add in f32 on the VPU, cast on store.
    acc = jnp.dot(p_ref[...], w_ref[...], preferred_element_type=jnp.float32)
    o_ref[...] = (acc + b_ref[...]).astype(o_ref.dtype)


def prepare_patch_embed_params(weight, bias, compute_dtype=jnp.bfloat16):
    """One-time prep (cache at init): conv weight (E, C, ph, pw) -> GEMM weight.

    Returns (w_mat (K, E) in compute_dtype, b_mat (1, E) f32).  No E padding:
    the kernel writes the true embed_dim so there is no post-kernel slice copy.
    """
    E, C, ph, pw = weight.shape
    K = C * ph * pw
    w_mat = weight.reshape(E, K).T                     # feature order (c, kh, kw)
    b_mat = bias.reshape(1, E).astype(jnp.float32)
    if compute_dtype is not None:
        w_mat = w_mat.astype(compute_dtype)
    return w_mat, b_mat


def patch_embed_forward(x, w_mat, b_mat, patch_size, *, tm=8192,
                        compute_dtype=jnp.bfloat16, out_dtype=None,
                        vmem_tile_budget_bytes=24 * 1024 * 1024):
    """x: (B, C, H, W); w_mat/b_mat from prepare_patch_embed_params.

    Returns (B, num_patches, embed_dim), matching PyTorch PatchEmbed.forward
    (proj(x).flatten(2).transpose(1, 2)).
    """
    B, C, H, W = x.shape
    ph, pw = patch_size
    Gh, Gw = H // ph, W // pw
    Np = Gh * Gw
    K = C * ph * pw
    M = B * Np
    E = w_mat.shape[1]
    out_dtype = out_dtype if out_dtype is not None else x.dtype

    # Patch extraction: cast FIRST so the XLA-materialized transpose round trip
    # happens at the narrow compute dtype.  Feature order (c, kh, kw) matches
    # w_mat.  (See TODO(synk) above about fusing this into the kernel.)
    xc = x if compute_dtype is None else x.astype(compute_dtype)
    patches = xc.reshape(B, C, Gh, ph, Gw, pw)
    patches = patches.transpose(0, 2, 4, 1, 3, 5).reshape(M, K)
    if w_mat.dtype != patches.dtype:
        w_mat = w_mat.astype(patches.dtype)            # tiny; normally a no-op

    # Row tiling: multiple of 8 (sublane rule); no M padding — Pallas handles a
    # ragged last block and those rows are never written back (out is (M, E)).
    tm_eff = min(_round_up(tm, 8), _round_up(M, 8))

    # Keep the double-buffered tile under budget (guards huge caller tm and
    # keeps the same tile safe on v7x's 64 MiB physical VMEM).
    in_bytes = jnp.dtype(patches.dtype).itemsize
    out_bytes = jnp.dtype(out_dtype).itemsize

    def _tile_bytes(t):
        return 2 * t * (K * in_bytes + E * out_bytes)

    while tm_eff > 8 and _tile_bytes(tm_eff) > vmem_tile_budget_bytes:
        tm_eff = _round_up(tm_eff // 2, 8)

    n_steps = pl.cdiv(M, tm_eff)
    if n_steps > 1 and n_steps % 2 == 1:
        # Even step count so the "parallel" grid axis splits evenly across
        # v7x's two TensorCores; harmless on single-TC v5e/v6e.
        tm_eff = min(tm_eff, _round_up(pl.cdiv(M, n_steps + 1), 8))
        n_steps = pl.cdiv(M, tm_eff)

    out = pl.pallas_call(
        _patch_embed_kernel,
        out_shape=jax.ShapeDtypeStruct((M, E), out_dtype),
        grid_spec=pltpu.PrefetchScalarGridSpec(
            num_scalar_prefetch=0,
            grid=(n_steps,),
            in_specs=[
                pl.BlockSpec((tm_eff, K), lambda i: (i, 0)),   # streamed row tiles
                pl.BlockSpec((K, E), lambda i: (0, 0)),        # weight stays resident
                pl.BlockSpec((1, E), lambda i: (0, 0)),        # bias stays resident
            ],
            out_specs=pl.BlockSpec((tm_eff, E), lambda i: (i, 0)),
        ),
        compiler_params=pltpu.CompilerParams(
            dimension_semantics=("parallel",),
            vmem_limit_bytes=32 * 1024 * 1024,
        ),
    )(patches, w_mat, b_mat)

    return out.reshape(B, Np, E)


def _reference_forward(x, weight, bias, patch_size):
    # Pure-JAX reference: strided conv (NCHW, OIHW) then flatten(2).transpose(1,2).
    y = jax.lax.conv_general_dilated(
        x, weight, window_strides=patch_size, padding="VALID",
        dimension_numbers=("NCHW", "OIHW", "NCHW"),
        precision=jax.lax.Precision.HIGHEST)
    y = y + bias.reshape(1, -1, 1, 1)
    B, E, Gh, Gw = y.shape
    return y.reshape(B, E, Gh * Gw).transpose(0, 2, 1)


if __name__ == "__main__":
    # Small, forward-consistent shapes: img=16, patch=4, in_chans=4, embed_dim=32.
    B, C, H, W = 2, 4, 16, 16
    patch_size = (4, 4)
    E = 32

    key = jax.random.PRNGKey(0)
    kx, kw, kb = jax.random.split(key, 3)
    x = jax.random.normal(kx, (B, C, H, W), dtype=jnp.float32)
    weight = 0.05 * jax.random.normal(
        kw, (E, C, patch_size[0], patch_size[1]), dtype=jnp.float32)
    bias = 0.01 * jax.random.normal(kb, (E,), dtype=jnp.float32)

    ref = _reference_forward(x, weight, bias, patch_size)
    Np = (H // patch_size[0]) * (W // patch_size[1])

    # 1) f32 compute path (tight tolerance vs the conv reference).
    w32, b32 = prepare_patch_embed_params(weight, bias, compute_dtype=None)
    out32 = jax.block_until_ready(
        patch_embed_forward(x, w32, b32, patch_size, compute_dtype=None))
    assert out32.shape == (B, Np, E)
    assert out32.dtype == jnp.float32
    assert jnp.allclose(out32, ref, atol=1e-3, rtol=1e-3), "f32 mismatch vs reference"

    # 2) Default path: bf16 compute (f32 accumulate + f32 bias), f32 x -> f32 out.
    wbf, bbf = prepare_patch_embed_params(weight, bias)
    out_bf = jax.block_until_ready(patch_embed_forward(x, wbf, bbf, patch_size))
    assert out_bf.shape == (B, Np, E)
    assert out_bf.dtype == jnp.float32
    assert jnp.allclose(out_bf, ref, atol=5e-2, rtol=5e-2), "bf16-compute mismatch"

    # 3) Full-bandwidth path: bf16 activations in -> bf16 out (typical bf16 Swin).
    out_b16 = jax.block_until_ready(
        patch_embed_forward(x.astype(jnp.bfloat16), wbf, bbf, patch_size))
    assert out_b16.shape == (B, Np, E)
    assert out_b16.dtype == jnp.bfloat16
    assert jnp.allclose(out_b16.astype(jnp.float32), ref, atol=5e-2, rtol=5e-2), \
        "bf16 in/out mismatch vs reference"

    print("KERNEL_OK")
</pallas_src>

<mosaic_0001>
module attributes {stable_mosaic.version = 11 : i64} {
  func.func @_patch_embed_kernel(%arg0: i32, %arg1: memref<32x64xf32, #tpu.memory_space<vmem>>, %arg2: memref<64x32xf32, #tpu.memory_space<vmem>>, %arg3: memref<1x32xf32, #tpu.memory_space<vmem>>, %arg4: memref<32x32xf32, #tpu.memory_space<vmem>>) attributes {dimension_semantics = [#tpu.dimension_semantics<parallel>], iteration_bounds = array<i64: 1>, scalar_prefetch = 0 : i64, scratch_operands = 0 : i64, tpu.core_type = #tpu.core_type<tc>, window_params = [{transform_indices = @transform_0, window_bounds = array<i64: 32, 64>}, {pipeline_mode = #tpu.pipeline_mode<synchronous>, transform_indices = @transform_1, window_bounds = array<i64: 64, 32>}, {pipeline_mode = #tpu.pipeline_mode<synchronous>, transform_indices = @transform_2, window_bounds = array<i64: 1, 32>}, {transform_indices = @transform_3, window_bounds = array<i64: 32, 32>}]} {
    %c0 = arith.constant 0 : index
    %c0_0 = arith.constant 0 : index
    %0 = vector.load %arg1[%c0, %c0_0] : memref<32x64xf32, #tpu.memory_space<vmem>>, vector<32x64xf32>
    %c0_1 = arith.constant 0 : index
    %c0_2 = arith.constant 0 : index
    %1 = vector.load %arg2[%c0_1, %c0_2] : memref<64x32xf32, #tpu.memory_space<vmem>>, vector<64x32xf32>
    %cst = arith.constant dense<0.000000e+00> : vector<32x32xf32>
    %2 = tpu.matmul %0, %1, %cst {dimension_numbers = #tpu.dot_dimension_numbers<[1], [0], [0], [1], [0, 0, 1, 1], [], []>} : vector<32x64xf32>, vector<64x32xf32>, vector<32x32xf32> -> vector<32x32xf32>
    %c0_3 = arith.constant 0 : index
    %c0_4 = arith.constant 0 : index
    %3 = vector.load %arg3[%c0_3, %c0_4] : memref<1x32xf32, #tpu.memory_space<vmem>>, vector<1x32xf32>
    %4 = vector.broadcast %3 : vector<1x32xf32> to vector<32x32xf32>
    %5 = arith.addf %2, %4 : vector<32x32xf32>
    %c0_5 = arith.constant 0 : index
    %c0_6 = arith.constant 0 : index
    %6 = vector.load %arg4[%c0_5, %c0_6] : memref<32x32xf32, #tpu.memory_space<vmem>>, vector<32x32xf32>
    tpu.vector_store %arg4[%c0_5, %c0_6], %5 {strides = array<i32>} : memref<32x32xf32, #tpu.memory_space<vmem>>, vector<32x32xf32>,
    return
  }
  func.func @transform_0(%arg0: i32) -> (i32, i32) {
    %c0_i32 = arith.constant 0 : i32
    %c0_i32_0 = arith.constant 0 : i32
    return %arg0, %c0_i32 : i32, i32
  }
  func.func @transform_1(%arg0: i32) -> (i32, i32) {
    %c0_i32 = arith.constant 0 : i32
    %c0_i32_0 = arith.constant 0 : i32
    %c0_i32_1 = arith.constant 0 : i32
    return %c0_i32, %c0_i32_0 : i32, i32
  }
  func.func @transform_2(%arg0: i32) -> (i32, i32) {
    %c0_i32 = arith.constant 0 : i32
    %c0_i32_0 = arith.constant 0 : i32
    %c0_i32_1 = arith.constant 0 : i32
    return %c0_i32, %c0_i32_0 : i32, i32
  }
  func.func @transform_3(%arg0: i32) -> (i32, i32) {
    %c0_i32 = arith.constant 0 : i32
    %c0_i32_0 = arith.constant 0 : i32
    return %arg0, %c0_i32 : i32, i32
  }
}

</mosaic_0001>

<llo_original>
// kernel: tpu_custom_call.1
$region0: #{tpu_custom_call.1}
  #allocation0 [shape = 'u32[]', space=smem, size = 0x4, offset = 0x4, fixed_abs, tag = 'smem constant byte address 0x4 - core index']
  #allocation1 [shape = 'u32[144,128]{1,0:T(1,128)}', space=vmem, size = 0x12000, scoped, tag = 'internal scratch']
  %s0 = inlined_call_operand.vmem [shape: f32[32,64], index: 0, kind: input, shape index: {}]
  %s1 = inlined_call_operand.vmem [shape: f32[64,32], index: 1, kind: input, shape index: {}]
  %s2 = inlined_call_operand.vmem [shape: f32[1,32], index: 2, kind: input, shape index: {}]
  %s3 = inlined_call_operand.hbm [shape: f32[32,32], index: 3, kind: output, shape index: {}]
  %s4 = sld [smem:[#allocation0]]
  $region22: #{tpu_custom_call.1} parent=0
    _
  %s6 = ssub.s32 1, %s4
  %s7 = scalar_select 0, %s6, %s4
  $region1: #{tpu_custom_call.1} parent=0
    #allocation2 [shape = 'u8[16384]{0}', space=vmem, size = 0x4000, scoped, tag = 'output window, operand 0, single buffered']
    #allocation3 [shape = 's32[1]{0}', space=sflag, size = 0x4, scoped, tag = 'scoped memory for tpu_custom_call.1']
    %8 = vsyncpa [#allocation3], 0
    // Predicated region
    $region2: #{tpu_custom_call.1} parent=1 // pred_check
      _
    $region3: #{tpu_custom_call.1} parent=1 // pred_check_branch
      %10 = sbr.rel (0) target = $region5
    $region4: #{tpu_custom_call.1} parent=1 // pred_region
      _
    $region5: #{tpu_custom_call.1} parent=1 // pred_fallthru
      _
    // Predicated region
    $region6: #{tpu_custom_call.1} parent=1 // pred_check
      _
    $region7: #{tpu_custom_call.1} parent=1 // pred_check_branch
      %12 = sbr.rel (0) target = $region9
    $region8: #{tpu_custom_call.1} parent=1 // pred_region
      _
    $region9: #{tpu_custom_call.1} parent=1 // pred_fallthru
      _
    // Predicated region
    $region10: #{tpu_custom_call.1} parent=1 // pred_check
      _
    $region11: #{tpu_custom_call.1} parent=1 // pred_check_branch
      %14 = sbr.rel (0) target = $region13
    $region12: #{tpu_custom_call.1} parent=1 // pred_region
      _
    $region13: #{tpu_custom_call.1} parent=1 // pred_fallthru
      _
    %v15 = vld [vmem:[%s0] sm:$0xff]
    %v16 = vld [vmem:[%s0 + $0x8] sm:$0xff]
    %v17 = vld [vmem:[%s0 + $0x10] sm:$0xff]
    %v18 = vld [vmem:[%s0 + $0x18] sm:$0xff]
    %v19 = vld [vmem:[%s1] sm:$0xff]
    %v20 = vld [vmem:[%s1 + $0x8] sm:$0xff]
    %v21 = vld [vmem:[%s1 + $0x10] sm:$0xff]
    %v22 = vld [vmem:[%s1 + $0x18] sm:$0xff]
    %v23 = vld [vmem:[%s1 + $0x20] sm:$0xff]
    %v24 = vld [vmem:[%s1 + $0x28] sm:$0xff]
    %v25 = vld [vmem:[%s1 + $0x30] sm:$0xff]
    %v26 = vld [vmem:[%s1 + $0x38] sm:$0xff]
    %v27 = vld [vmem:[%s2] sm:$0x1]
    %v29 = vlaneseq
    %v30 = vshrl.u32 %v29, 7
    %v31 = vsub.s32 0, %v30
    %v32 = vrot.slane %v27, %v31
    %vm34 = vcmask 523264
    %v36 = vsel %vm34, %v15, 0
    %v39 = vsel %vm34, %v16, 0
    %v42 = vsel %vm34, %v17, 0
    %v45 = vsel %vm34, %v18, 0
    %47 = vmatprep.subr.mxu0 0.0
    %48 = vmatpush1.msra.mxu0 %v19
    %49 = vmatprep.subr.mxu0 0.0
    %50 = vmatpush1.msra.mxu0 %v20
    %51 = vmatprep.subr.mxu0 0.0
    %52 = vmatpush1.msra.mxu0 %v21
    %53 = vmatprep.subr.mxu0 0.0
    %54 = vmatpush1.msra.mxu0 %v22
    %55 = vmatprep.subr.mxu0 0.0
    %56 = vmatpush1.msra.mxu0 %v23
    %57 = vmatprep.subr.mxu0 0.0
    %58 = vmatpush1.msra.mxu0 %v24
    %59 = vmatprep.subr.mxu0 0.0
    %60 = vmatpush1.msra.mxu0 %v25
    %61 = vmatprep.subr.mxu0 0.0
    %62 = vmatpush1.msra.mxu0 %v26
    %63 = vmatprep.subr.mxu0 0.0
    %64 = vmatpush1.msra.mxu0 0.0
    %65 = vmatprep.subr.mxu0 0.0
    %66 = vmatpush1.msra.mxu0 0.0
    %67 = vmatprep.subr.mxu0 0.0
    %68 = vmatpush1.msra.mxu0 0.0
    %69 = vmatprep.subr.mxu0 0.0
    %70 = vmatpush1.msra.mxu0 0.0
    %71 = vmatprep.subr.mxu0 0.0
    %72 = vmatpush1.msra.mxu0 0.0
    %73 = vmatprep.subr.mxu0 0.0
    %74 = vmatpush1.msra.mxu0 0.0
    %75 = vmatprep.subr.mxu0 0.0
    %76 = vmatpush1.msra.mxu0 0.0
    %77 = vmatprep.subr.mxu0 0.0
    %78 = vmatpush1.msra.mxu0 0.0
    %79 = vmatprep.subr.mxu0 0.0
    %80 = vmatpush1.msra.mxu0 0.0
    %81 = vmatprep.subr.mxu0 0.0
    %82 = vmatpush1.msra.mxu0 0.0
    %83 = vmatprep.subr.mxu0 0.0
    %84 = vmatpush1.msra.mxu0 0.0
    %85 = vmatprep.subr.mxu0 0.0
    %86 = vmatpush1.msra.mxu0 0.0
    %87 = vmatprep.subr.mxu0 0.0
    %88 = vmatpush1.msra.mxu0 0.0
    %89 = vmatprep.subr.mxu0 0.0
    %90 = vmatpush1.msra.mxu0 0.0
    %91 = vmatprep.subr.mxu0 0.0
    %92 = vmatpush1.msra.mxu0 0.0
    %93 = vmatprep.subr.mxu0 0.0
    %94 = vmatpush1.msra.mxu0 0.0
    %95 = vmatprep.subr.mxu0 0.0
    %96 = vmatpush1.msra.mxu0 0.0
    %97 = vmatprep.subr.mxu0 0.0
    %98 = vmatpush1.msra.mxu0 0.0
    %99 = vmatprep.subr.mxu0 0.0
    %100 = vmatpush1.msra.mxu0 0.0
    %101 = vmatprep.subr.mxu0 0.0
    %102 = vmatpush1.msra.mxu0 0.0
    %103 = vmatprep.subr.mxu0 0.0
    %104 = vmatpush1.msra.mxu0 0.0
    %105 = vmatprep.subr.mxu0 0.0
    %106 = vmatpush1.msra.mxu0 0.0
    %107 = vmatprep.subr.mxu0 0.0
    %108 = vmatpush1.msra.mxu0 0.0
    %109 = vmatprep.subr.mxu0 0.0
    %110 = vmatpush1.msra.mxu0 0.0
    %111 = vmatprep.mubr.f32.mxu0 0.0
    %112 = vmatmul.mubr.f32.gmra.mrb[0].mxu0 %v36
    %v113 = vpop.f32.mrb[0].mxu0
    %v114 = vadd.f32 %v32, %v113
    %v115 = vpop.f32.mrb[0].mxu0
    %116 = vmatprep.mubr.f32.mxu0 0.0
    %117 = vmatmul.mubr.f32.gmra.mrb[0].mxu0 %v39
    %v118 = vpop.f32.mrb[0].mxu0
    %v119 = vadd.f32 %v32, %v118
    %v120 = vpop.f32.mrb[0].mxu0
    %121 = vmatprep.mubr.f32.mxu0 0.0
    %122 = vmatmul.mubr.f32.gmra.mrb[0].mxu0 %v42
    %v123 = vpop.f32.mrb[0].mxu0
    %v124 = vadd.f32 %v32, %v123
    %v125 = vpop.f32.mrb[0].mxu0
    %126 = vmatprep.mubr.f32.mxu0 0.0
    %127 = vmatmul.mubr.f32.gmra.mrb[0].mxu0 %v45
    %v128 = vpop.f32.mrb[0].mxu0
    %v129 = vadd.f32 %v32, %v128
    %v130 = vpop.f32.mrb[0].mxu0
    %131 = vdwg.mxu0
    %vm132 = vcmask 261120
    %133 = vst.msk [vmem:[#allocation2] sm:$0xff] %vm132, %v114
    %134 = vst.msk [vmem:[#allocation2 + $0x8] sm:$0xff] %vm132, %v119
    %135 = vst.msk [vmem:[#allocation2 + $0x10] sm:$0xff] %vm132, %v124
    %136 = vst.msk [vmem:[#allocation2 + $0x18] sm:$0xff] %vm132, %v129
    // Predicated region
    $region14: #{tpu_custom_call.1} parent=1 // pred_check
      _
    $region15: #{tpu_custom_call.1} parent=1 // pred_check_branch
      %138 = sbr.rel (0) target = $region17
    $region16: #{tpu_custom_call.1} parent=1 // pred_region
      %s140 = ssub.s32 512, 512
      %141 = vsyncadd [#allocation3], %s140
      %s142 = sshll.u32 [#allocation2], 4
      %s143 = int_to_ptr.vmem [resolvable:$true] %s142
      %148 = dma.vmem_to_hbm [thread:$0]  %s143, 512, %s3, [#allocation3], 128, 128, 8
    $region17: #{tpu_custom_call.1} parent=1 // pred_fallthru
      _
    // Predicated region
    $region18: #{tpu_custom_call.1} parent=1 // pred_check
      _
    $region19: #{tpu_custom_call.1} parent=1 // pred_check_branch
      %150 = sbr.rel (0) target = $region21
    $region20: #{tpu_custom_call.1} parent=1 // pred_region
      %151 = dma.done [#allocation3], 512
    $region21: #{tpu_custom_call.1} parent=1 // pred_fallthru
      _
    %152 = vsyncpa [#allocation3], 1

</llo_original>
